<compile_context>
chip_gen: v6e
topology: v6e:2x2x1
jax: 0.10.0
libtpu: 0.0.40
codegen_flags: <defaults>
</compile_context>

<pallas_src>
import functools

import jax
import jax.numpy as jnp
from jax.experimental import pallas as pl
from jax.experimental.pallas import tpu as pltpu


def _round_up(x, m):
    return ((x + m - 1) // m) * m


# Per-kernel budget for the double-buffered streamed blocks.  Chosen to stay
# under the *default* scoped-VMEM limit of every generation (v5e ~16 MiB,
# v6e/v7x ~32 MiB scoped; v7x only has 64 MiB physical), so no
# vmem_limit_bytes override is needed and nothing can OOM/thrash on v7x.
_STREAM_BUDGET_BYTES = 10 << 20
_TILE_CAP = 16384


def _pick_tile(hw, bytes_per_pos):
    """Largest 128-multiple HW tile whose streamed (double-buffered) bytes fit
    the per-kernel VMEM budget."""
    tile = _STREAM_BUDGET_BYTES // max(int(bytes_per_pos), 1)
    tile = min(tile, _TILE_CAP, _round_up(hw, 128))
    return max(128, (tile // 128) * 128)


# ---------------------------------------------------------------------------
# Kernel 1: per-class statistics for EstimatorCV.update_CV
#   Per-image resident accumulators (grid = (N, cdiv(HW, tile))):
#     sums[c, :]  += sum_t onehot[c, t] * feat[:, t]
#     sumsq[c, :] += sum_t onehot[c, t] * feat[:, t]^2
#     cnt[c, 0]   += sum_t onehot[c, t]
#   N axis is 'parallel' (per-n output blocks -> race free, uses both v7x TCs);
#   the HW-tile axis is the resident reduction axis ('arbitrary').
# ---------------------------------------------------------------------------
def _stats_kernel(feat_ref, lab_ref, sums_ref, sumsq_ref, cnt_ref, *, hw):
    j = pl.program_id(1)

    @pl.when(j == 0)
    def _():
        sums_ref[...] = jnp.zeros_like(sums_ref)
        sumsq_ref[...] = jnp.zeros_like(sumsq_ref)
        cnt_ref[...] = jnp.zeros_like(cnt_ref)

    feat = feat_ref[...].astype(jnp.float32)                     # (A, T)
    labs = lab_ref[...]                                          # (1, T) int32
    T = feat.shape[1]
    C = sums_ref.shape[0]

    # Ragged-tail mask: grid = cdiv(HW, T); positions >= HW contribute nothing.
    pos = j * T + jax.lax.broadcasted_iota(jnp.int32, (1, T), 1)
    valid = pos < hw
    labs = jnp.where(valid, labs, -1)       # -1 matches no class
    feat = jnp.where(valid, feat, 0.0)      # keep 0*garbage(NaN) out of the MXU

    cls = jax.lax.broadcasted_iota(jnp.int32, (C, T), 0)
    onehot = (labs == cls).astype(jnp.float32)                   # (C, T)
    # Ignore label 255 never matches a class -> excluded from statistics.

    # Two MXU matmuls (contraction over the lane axis T); no (2A+1, T) concat
    # temporary.  NOTE(v6e): if the bundle dump shows an in-loop vxpose of the
    # feat operand, re-orient the contraction (verify before changing).
    sums_ref[...] += jnp.einsum("ct,at->ca", onehot, feat,
                                preferred_element_type=jnp.float32)
    sumsq_ref[...] += jnp.einsum("ct,at->ca", onehot, feat * feat,
                                 preferred_element_type=jnp.float32)
    cnt_ref[...] += jnp.sum(onehot, axis=-1, keepdims=True)      # XLU reduce


def _class_stats(feat3, lab3, class_num, hw, tile):
    N, A, _ = feat3.shape
    kernel = functools.partial(_stats_kernel, hw=hw)
    sums, sumsq, cnt = pl.pallas_call(
        kernel,
        out_shape=(
            jax.ShapeDtypeStruct((N, class_num, A), jnp.float32),
            jax.ShapeDtypeStruct((N, class_num, A), jnp.float32),
            jax.ShapeDtypeStruct((N, class_num, 1), jnp.float32),
        ),
        grid_spec=pltpu.PrefetchScalarGridSpec(
            num_scalar_prefetch=0,
            grid=(N, pl.cdiv(hw, tile)),
            in_specs=[
                pl.BlockSpec((None, A, tile), lambda n, j: (n, 0, j)),
                pl.BlockSpec((None, 1, tile), lambda n, j: (n, 0, j)),
            ],
            out_specs=[
                pl.BlockSpec((None, class_num, A), lambda n, j: (n, 0, 0)),
                pl.BlockSpec((None, class_num, A), lambda n, j: (n, 0, 0)),
                pl.BlockSpec((None, class_num, 1), lambda n, j: (n, 0, 0)),
            ],
        ),
        compiler_params=pltpu.CompilerParams(
            dimension_semantics=("parallel", "arbitrary")),
    )(feat3, lab3)
    # Tiny f32 combine of the per-image partial accumulators.
    return sums.sum(0), sumsq.sum(0), cnt.sum(0)[:, 0]


# ---------------------------------------------------------------------------
# Kernel 2: ISDA augmentation using the precomputed (C, C) class-pair table.
#   sigma2[c, t] = ST[c, label_t]  (gathered via one matmul with the one-hot)
#   aug[c, t]    = y[c, t] + 0.5 * sigma2[c, t]
#   (label 255 / garbage tail -> all-zero one-hot column -> sigma2 == 0;
#    out-of-range tail columns are dropped by the masked boundary writeback.)
# ---------------------------------------------------------------------------
def _isda_kernel(y_ref, lab_ref, st_ref, out_ref):
    labs = lab_ref[...]                                          # (1, T) int32
    C = st_ref.shape[1]
    T = labs.shape[1]
    cls = jax.lax.broadcasted_iota(jnp.int32, (C, T), 0)
    onehot = (labs == cls).astype(jnp.float32)                   # (C, T)
    sigma2 = jnp.dot(st_ref[...], onehot,
                     preferred_element_type=jnp.float32)         # (C, T)
    out_ref[...] = (y_ref[...].astype(jnp.float32)
                    + 0.5 * sigma2).astype(out_ref.dtype)


def _isda_aug(y3, lab3, st, hw, tile):
    N, C, _ = y3.shape
    return pl.pallas_call(
        _isda_kernel,
        out_shape=jax.ShapeDtypeStruct((N, C, hw), y3.dtype),
        grid_spec=pltpu.PrefetchScalarGridSpec(
            num_scalar_prefetch=0,
            grid=(N, pl.cdiv(hw, tile)),
            in_specs=[
                pl.BlockSpec((None, C, tile), lambda n, j: (n, 0, j)),
                pl.BlockSpec((None, 1, tile), lambda n, j: (n, 0, j)),
                pl.BlockSpec((C, C), lambda n, j: (0, 0)),
            ],
            out_specs=pl.BlockSpec((None, C, tile), lambda n, j: (n, 0, j)),
        ),
        compiler_params=pltpu.CompilerParams(
            dimension_semantics=("parallel", "parallel")),
    )(y3, lab3, st)


# ---------------------------------------------------------------------------
# EstimatorCV state blend (tiny (C, A) elementwise glue; stays in plain JAX)
# ---------------------------------------------------------------------------
def _estimator_update(sums, sumsq, cnt, ave_prev, cov_prev, amount_prev):
    amount_cxa = jnp.where(cnt == 0.0, 1.0, cnt)[:, None]        # (C, 1)
    ave = sums / amount_cxa                                      # (C, A)
    # Single-pass variance E[x^2] - E[x]^2, clamped >= 0 to guard the
    # cancellation this form has vs. the reference two-pass sum((x-mean)^2).
    # TODO(synk): a shifted/Welford-style accumulation would remove the
    # cancellation entirely for large-mean / low-variance features.
    var = jnp.maximum(
        sumsq / amount_cxa - ave * ave * (cnt[:, None] / amount_cxa), 0.0)
    denom = cnt + amount_prev
    weight = jnp.where(denom == 0.0, 0.0,
                       cnt / jnp.where(denom == 0.0, 1.0, denom))[:, None]
    additional = weight * (1.0 - weight) * (ave_prev - ave) ** 2
    cov_new = cov_prev * (1.0 - weight) + var * weight + additional
    ave_new = ave_prev * (1.0 - weight) + ave * weight
    amount_new = amount_prev + cnt
    return cov_new, ave_new, amount_new


# ---------------------------------------------------------------------------
# ISDALoss (forward_2d) wrapper
# ---------------------------------------------------------------------------
class ISDALossPallas:
    def __init__(self, feature_num, class_num):
        self.feature_num = feature_num
        self.class_num = class_num
        self.CoVariance = jnp.zeros((class_num, feature_num), jnp.float32)
        self.Ave = jnp.zeros((class_num, feature_num), jnp.float32)
        self.Amount = jnp.zeros((class_num,), jnp.float32)

    def forward_2d(self, features, conv_weight, y, target_x, ratio):
        N, A, H, W = features.shape
        C = self.class_num
        HW = H * W

        # F.interpolate(target, (H, W), mode='nearest'): target is already at
        # (H, W) here, so the nearest resize is the identity.
        # TODO(synk): general nearest-neighbor resize of target_x not implemented.
        feat3 = features.reshape(N, A, HW)                  # native dtype, no pad/cast
        y3 = y.reshape(N, C, HW)                            # native dtype, no pad/cast
        lab3 = target_x.reshape(N, 1, HW).astype(jnp.int32) # tiny N*HW cast

        # Tile sizing against a per-kernel streamed-bytes budget that fits the
        # default scoped VMEM of every generation (v5e 16 MiB, v6e/v7x 32 MiB).
        tile_stats = _pick_tile(HW, 2 * (A * features.dtype.itemsize + 4))
        tile_isda = _pick_tile(HW, 2 * (2 * C * y.dtype.itemsize + 4))

        # EstimatorCV.update_CV: hot NHW reduction in Pallas, tiny blend in JAX.
        sums, sumsq, cnt = _class_stats(feat3, lab3, C, HW, tile_stats)
        self.CoVariance, self.Ave, self.Amount = _estimator_update(
            sums, sumsq, cnt, self.Ave, self.CoVariance, self.Amount)

        # Class-pair table ST[c, l] = ratio * sum_a (W[c]-W[l])^2 * CV[l]
        # via three small GEMMs (no (C, C, A) temporary); clamped >= 0 because
        # the expanded form can cancel to tiny negatives.
        w_m = conv_weight.reshape(C, A).astype(jnp.float32)
        cv = self.CoVariance
        t1 = (w_m * w_m) @ cv.T                 # sum_a W[c]^2      CV[l]
        t2 = w_m @ (w_m * cv).T                 # sum_a W[c] W[l]   CV[l]
        t3 = jnp.sum(w_m * w_m * cv, axis=1)    # sum_a W[l]^2      CV[l]
        st = float(ratio) * jnp.maximum(t1 - 2.0 * t2 + t3[None, :], 0.0)

        # isda_aug hot path in Pallas (output already (N, C, HW): no slice).
        aug3 = _isda_aug(y3, lab3, st.astype(jnp.float32), HW, tile_isda)
        return aug3.reshape(N, C, H, W)


# ---------------------------------------------------------------------------
# Pure-JAX reference reproducing the PyTorch formulas (for verification)
# ---------------------------------------------------------------------------
def _reference_forward(features, conv_weight, y, target_x, ratio, class_num):
    N, A, H, W = features.shape
    C = class_num
    feat = jnp.transpose(features, (0, 2, 3, 1)).reshape(-1, A).astype(jnp.float32)
    logits = jnp.transpose(y, (0, 2, 3, 1)).reshape(-1, C).astype(jnp.float32)
    labels = target_x.reshape(-1).astype(jnp.int32)

    onehot = jax.nn.one_hot(labels, C, dtype=jnp.float32)            # (NHW, C)
    feat_nca = feat[:, None, :] * onehot[:, :, None]                 # (NHW, C, A)
    amount = onehot.sum(0)[:, None]                                  # (C, 1)
    amount_cxa = jnp.where(amount == 0, 1.0, amount)
    ave = feat_nca.sum(0) / amount_cxa
    var_temp = ((feat_nca - ave[None] * onehot[:, :, None]) ** 2).sum(0) / amount_cxa
    sum_w = onehot.sum(0)[:, None]
    weight = sum_w / (sum_w + 0.0)                                   # Amount_prev == 0
    weight = jnp.where(jnp.isnan(weight), 0.0, weight)
    additional = weight * (1.0 - weight) * (0.0 - ave) ** 2
    cov = var_temp * weight + additional                             # CoVariance_prev == 0

    mask = (labels == 255).astype(jnp.int32)
    labels_eff = (1 - mask) * labels
    W_m = conv_weight.reshape(C, A).astype(jnp.float32)
    NxW_kj = W_m[labels_eff]                                         # (NHW, A)
    CV_temp = cov[labels_eff]                                        # (NHW, A)
    sigma2 = ratio * (((W_m[None] - NxW_kj[:, None, :]) ** 2)
                      * CV_temp[:, None, :]).sum(2)                  # (NHW, C)
    aug = logits + 0.5 * sigma2 * (1 - mask)[:, None]
    return jnp.transpose(aug.reshape(N, H, W, C), (0, 3, 1, 2))


if __name__ == "__main__":
    key = jax.random.PRNGKey(0)
    # batch, feature_num, spatial (non-multiple of 128 to exercise the ragged
    # tail masking), class_num
    N, A, H, W, C = 2, 32, 16, 15, 8
    k1, k2, k3 = jax.random.split(key, 3)

    features = jax.random.normal(k1, (N, A, H, W), jnp.float32)
    # final_conv (conv_seg): 1x1 conv weight, deterministically initialized.
    conv_weight = 0.1 * jax.random.normal(k2, (C, A, 1, 1), jnp.float32)
    # logits y = final_conv(features)  (1x1 conv, no bias) -- plain-JAX glue.
    y = jnp.einsum("nahw,ca->nchw", features, conv_weight.reshape(C, A))
    # ground-truth labels (N, 1, H, W) in [0, C), with an ignore (255) band.
    target = jax.random.randint(k3, (N, 1, H, W), 0, C)
    target = target.at[:, :, :2, :].set(255)
    target_x = target.astype(jnp.float32)
    ratio = 0.5

    loss_mod = ISDALossPallas(feature_num=A, class_num=C)
    out = loss_mod.forward_2d(features, conv_weight, y, target_x, ratio)
    out = jax.block_until_ready(out)

    assert out.shape == (N, C, H, W), out.shape
    ref = _reference_forward(features, conv_weight, y, target_x, ratio, C)
    err = float(jnp.max(jnp.abs(out - ref)))
    assert jnp.allclose(out, ref, rtol=1e-3, atol=1e-3), err
    print("KERNEL_OK")
</pallas_src>

<mosaic_0001>
module attributes {stable_mosaic.version = 11 : i64} {
  func.func @_stats_kernel(%arg0: i32, %arg1: i32, %arg2: memref<1x32x256xf32, #tpu.memory_space<vmem>>, %arg3: memref<1x1x256xi32, #tpu.memory_space<vmem>>, %arg4: memref<1x8x32xf32, #tpu.memory_space<vmem>>, %arg5: memref<1x8x32xf32, #tpu.memory_space<vmem>>, %arg6: memref<1x8x1xf32, #tpu.memory_space<vmem>>) attributes {dimension_semantics = [#tpu.dimension_semantics<parallel>, #tpu.dimension_semantics<arbitrary>], iteration_bounds = array<i64: 2, 1>, scalar_prefetch = 0 : i64, scratch_operands = 0 : i64, tpu.core_type = #tpu.core_type<tc>, window_params = [{transform_indices = @transform_0, window_bounds = array<i64: 1, 32, 256>}, {transform_indices = @transform_1, window_bounds = array<i64: 1, 1, 256>}, {transform_indices = @transform_2, window_bounds = array<i64: 1, 8, 32>}, {transform_indices = @transform_3, window_bounds = array<i64: 1, 8, 32>}, {transform_indices = @transform_4, window_bounds = array<i64: 1, 8, 1>}]} {
    %c0_i32 = arith.constant 0 : i32
    %0 = arith.cmpi eq, %arg1, %c0_i32 : i32
    %1 = arith.extui %0 : i1 to i32
    %c0_i32_0 = arith.constant 0 : i32
    %2 = arith.cmpi ne, %1, %c0_i32_0 : i32
    scf.if %2 {
      %cst_27 = arith.constant 0.000000e+00 : f32
      %47 = vector.broadcast %cst_27 : f32 to vector<8x32xf32>
      %c0_28 = arith.constant 0 : index
      %c0_29 = arith.constant 0 : index
      %c0_30 = arith.constant 0 : index
      %48 = vector.load %arg4[%c0_28, %c0_29, %c0_30] : memref<1x8x32xf32, #tpu.memory_space<vmem>>, vector<1x8x32xf32>
      %49 = vector.shape_cast %48 : vector<1x8x32xf32> to vector<8x32xf32>
      %50 = vector.shape_cast %47 : vector<8x32xf32> to vector<1x8x32xf32>
      tpu.vector_store %arg4[%c0_28, %c0_29, %c0_30], %50 {strides = array<i32>} : memref<1x8x32xf32, #tpu.memory_space<vmem>>, vector<1x8x32xf32>,
      %cst_31 = arith.constant 0.000000e+00 : f32
      %51 = vector.broadcast %cst_31 : f32 to vector<8x32xf32>
      %c0_32 = arith.constant 0 : index
      %c0_33 = arith.constant 0 : index
      %c0_34 = arith.constant 0 : index
      %52 = vector.load %arg5[%c0_32, %c0_33, %c0_34] : memref<1x8x32xf32, #tpu.memory_space<vmem>>, vector<1x8x32xf32>
      %53 = vector.shape_cast %52 : vector<1x8x32xf32> to vector<8x32xf32>
      %54 = vector.shape_cast %51 : vector<8x32xf32> to vector<1x8x32xf32>
      tpu.vector_store %arg5[%c0_32, %c0_33, %c0_34], %54 {strides = array<i32>} : memref<1x8x32xf32, #tpu.memory_space<vmem>>, vector<1x8x32xf32>,
      %cst_35 = arith.constant 0.000000e+00 : f32
      %55 = vector.broadcast %cst_35 : f32 to vector<8x1xf32>
      %c0_36 = arith.constant 0 : index
      %c0_37 = arith.constant 0 : index
      %c0_38 = arith.constant 0 : index
      %56 = vector.load %arg6[%c0_36, %c0_37, %c0_38] : memref<1x8x1xf32, #tpu.memory_space<vmem>>, vector<1x8x1xf32>
      %57 = vector.shape_cast %56 : vector<1x8x1xf32> to vector<8x1xf32>
      %58 = vector.shape_cast %55 : vector<8x1xf32> to vector<1x8x1xf32>
      tpu.vector_store %arg6[%c0_36, %c0_37, %c0_38], %58 {strides = array<i32>} : memref<1x8x1xf32, #tpu.memory_space<vmem>>, vector<1x8x1xf32>,
    } else {
    }
    %c0 = arith.constant 0 : index
    %c0_1 = arith.constant 0 : index
    %c0_2 = arith.constant 0 : index
    %3 = vector.load %arg2[%c0, %c0_1, %c0_2] : memref<1x32x256xf32, #tpu.memory_space<vmem>>, vector<1x32x256xf32>
    %4 = vector.shape_cast %3 : vector<1x32x256xf32> to vector<32x256xf32>
    %c0_3 = arith.constant 0 : index
    %c0_4 = arith.constant 0 : index
    %c0_5 = arith.constant 0 : index
    %5 = vector.load %arg3[%c0_3, %c0_4, %c0_5] : memref<1x1x256xi32, #tpu.memory_space<vmem>>, vector<1x1x256xi32>
    %6 = vector.shape_cast %5 : vector<1x1x256xi32> to vector<1x256xi32>
    %c256_i32 = arith.constant 256 : i32
    %7 = arith.muli %arg1, %c256_i32 : i32
    %8 = tpu.iota {dimensions = array<i32: 1>} : vector<1x256xi32>
    %9 = vector.broadcast %7 : i32 to vector<1x256xi32>
    %10 = arith.addi %9, %8 : vector<1x256xi32>
    %c240_i32 = arith.constant 240 : i32
    %11 = vector.broadcast %c240_i32 : i32 to vector<1x256xi32>
    %12 = arith.cmpi slt, %10, %11 : vector<1x256xi32>
    %c-1_i32 = arith.constant -1 : i32
    %13 = vector.broadcast %c-1_i32 : i32 to vector<1x256xi32>
    %14 = arith.select %12, %6, %13 : vector<1x256xi1>, vector<1x256xi32>
    %cst = arith.constant 0.000000e+00 : f32
    %15 = vector.shape_cast %12 : vector<1x256xi1> to vector<1x256xi1>
    %16 = vector.broadcast %15 : vector<1x256xi1> to vector<32x256xi1>
    %17 = vector.broadcast %cst : f32 to vector<32x256xf32>
    %18 = arith.select %16, %4, %17 : vector<32x256xi1>, vector<32x256xf32>
    %19 = tpu.iota {dimensions = array<i32: 0>} : vector<8x256xi32>
    %20 = vector.broadcast %14 : vector<1x256xi32> to vector<8x256xi32>
    %21 = arith.cmpi eq, %20, %19 : vector<8x256xi32>
    %22 = arith.extui %21 : vector<8x256xi1> to vector<8x256xi32>
    %23 = arith.sitofp %22 : vector<8x256xi32> to vector<8x256xf32>
    %c0_6 = arith.constant 0 : index
    %c0_7 = arith.constant 0 : index
    %c0_8 = arith.constant 0 : index
    %24 = vector.load %arg4[%c0_6, %c0_7, %c0_8] : memref<1x8x32xf32, #tpu.memory_space<vmem>>, vector<1x8x32xf32>
    %25 = vector.shape_cast %24 : vector<1x8x32xf32> to vector<8x32xf32>
    "tpu.trace_start"() <{level = 10 : i32, message = "ct,at->ca"}> : () -> ()
    %cst_9 = arith.constant dense<0.000000e+00> : vector<8x32xf32>
    %26 = tpu.matmul %23, %18, %cst_9 {dimension_numbers = #tpu.dot_dimension_numbers<[1], [1], [0], [0], [0, 0, 1, 0], [], []>} : vector<8x256xf32>, vector<32x256xf32>, vector<8x32xf32> -> vector<8x32xf32>
    "tpu.trace_stop"() : () -> ()
    %27 = arith.addf %25, %26 : vector<8x32xf32>
    %c0_10 = arith.constant 0 : index
    %c0_11 = arith.constant 0 : index
    %c0_12 = arith.constant 0 : index
    %28 = vector.load %arg4[%c0_10, %c0_11, %c0_12] : memref<1x8x32xf32, #tpu.memory_space<vmem>>, vector<1x8x32xf32>
    %29 = vector.shape_cast %28 : vector<1x8x32xf32> to vector<8x32xf32>
    %30 = vector.shape_cast %27 : vector<8x32xf32> to vector<1x8x32xf32>
    tpu.vector_store %arg4[%c0_10, %c0_11, %c0_12], %30 {strides = array<i32>} : memref<1x8x32xf32, #tpu.memory_space<vmem>>, vector<1x8x32xf32>,
    %c0_13 = arith.constant 0 : index
    %c0_14 = arith.constant 0 : index
    %c0_15 = arith.constant 0 : index
    %31 = vector.load %arg5[%c0_13, %c0_14, %c0_15] : memref<1x8x32xf32, #tpu.memory_space<vmem>>, vector<1x8x32xf32>
    %32 = vector.shape_cast %31 : vector<1x8x32xf32> to vector<8x32xf32>
    %33 = arith.mulf %18, %18 : vector<32x256xf32>
    "tpu.trace_start"() <{level = 10 : i32, message = "ct,at->ca"}> : () -> ()
    %cst_16 = arith.constant dense<0.000000e+00> : vector<8x32xf32>
    %34 = tpu.matmul %23, %33, %cst_16 {dimension_numbers = #tpu.dot_dimension_numbers<[1], [1], [0], [0], [0, 0, 1, 0], [], []>} : vector<8x256xf32>, vector<32x256xf32>, vector<8x32xf32> -> vector<8x32xf32>
    "tpu.trace_stop"() : () -> ()
    %35 = arith.addf %32, %34 : vector<8x32xf32>
    %c0_17 = arith.constant 0 : index
    %c0_18 = arith.constant 0 : index
    %c0_19 = arith.constant 0 : index
    %36 = vector.load %arg5[%c0_17, %c0_18, %c0_19] : memref<1x8x32xf32, #tpu.memory_space<vmem>>, vector<1x8x32xf32>
    %37 = vector.shape_cast %36 : vector<1x8x32xf32> to vector<8x32xf32>
    %38 = vector.shape_cast %35 : vector<8x32xf32> to vector<1x8x32xf32>
    tpu.vector_store %arg5[%c0_17, %c0_18, %c0_19], %38 {strides = array<i32>} : memref<1x8x32xf32, #tpu.memory_space<vmem>>, vector<1x8x32xf32>,
    %c0_20 = arith.constant 0 : index
    %c0_21 = arith.constant 0 : index
    %c0_22 = arith.constant 0 : index
    %39 = vector.load %arg6[%c0_20, %c0_21, %c0_22] : memref<1x8x1xf32, #tpu.memory_space<vmem>>, vector<1x8x1xf32>
    %40 = vector.shape_cast %39 : vector<1x8x1xf32> to vector<8x1xf32>
    %cst_23 = arith.constant dense<0.000000e+00> : vector<8xf32>
    %41 = vector.multi_reduction <add>, %23, %cst_23 [1] : vector<8x256xf32> to vector<8xf32>
    %42 = vector.shape_cast %41 : vector<8xf32> to vector<8x1xf32>
    %43 = arith.addf %40, %42 : vector<8x1xf32>
    %c0_24 = arith.constant 0 : index
    %c0_25 = arith.constant 0 : index
    %c0_26 = arith.constant 0 : index
    %44 = vector.load %arg6[%c0_24, %c0_25, %c0_26] : memref<1x8x1xf32, #tpu.memory_space<vmem>>, vector<1x8x1xf32>
    %45 = vector.shape_cast %44 : vector<1x8x1xf32> to vector<8x1xf32>
    %46 = vector.shape_cast %43 : vector<8x1xf32> to vector<1x8x1xf32>
    tpu.vector_store %arg6[%c0_24, %c0_25, %c0_26], %46 {strides = array<i32>} : memref<1x8x1xf32, #tpu.memory_space<vmem>>, vector<1x8x1xf32>,
    return
  }
  func.func @transform_0(%arg0: i32, %arg1: i32) -> (i32, i32, i32) {
    %c0_i32 = arith.constant 0 : i32
    %c0_i32_0 = arith.constant 0 : i32
    return %arg0, %c0_i32, %arg1 : i32, i32, i32
  }
  func.func @transform_1(%arg0: i32, %arg1: i32) -> (i32, i32, i32) {
    %c0_i32 = arith.constant 0 : i32
    %c0_i32_0 = arith.constant 0 : i32
    return %arg0, %c0_i32, %arg1 : i32, i32, i32
  }
  func.func @transform_2(%arg0: i32, %arg1: i32) -> (i32, i32, i32) {
    %c0_i32 = arith.constant 0 : i32
    %c0_i32_0 = arith.constant 0 : i32
    %c0_i32_1 = arith.constant 0 : i32
    return %arg0, %c0_i32, %c0_i32_0 : i32, i32, i32
  }
  func.func @transform_3(%arg0: i32, %arg1: i32) -> (i32, i32, i32) {
    %c0_i32 = arith.constant 0 : i32
    %c0_i32_0 = arith.constant 0 : i32
    %c0_i32_1 = arith.constant 0 : i32
    return %arg0, %c0_i32, %c0_i32_0 : i32, i32, i32
  }
  func.func @transform_4(%arg0: i32, %arg1: i32) -> (i32, i32, i32) {
    %c0_i32 = arith.constant 0 : i32
    %c0_i32_0 = arith.constant 0 : i32
    %c0_i32_1 = arith.constant 0 : i32
    return %arg0, %c0_i32, %c0_i32_0 : i32, i32, i32
  }
}

</mosaic_0001>

<llo_original>
// kernel: tpu_custom_call.1
$region0: #{tpu_custom_call.1}
  #allocation0 [shape = 'u32[]', space=smem, size = 0x4, offset = 0x4, fixed_abs, tag = 'smem constant byte address 0x4 - core index']
  #allocation1 [shape = 'u32[144,128]{1,0:T(1,128)}', space=vmem, size = 0x12000, scoped, tag = 'internal scratch']
  %s0 = inlined_call_operand.hbm [shape: f32[2,32,240], index: 0, kind: input, shape index: {}]
  %s1 = inlined_call_operand.hbm [shape: s32[2,1,240], index: 1, kind: input, shape index: {}]
  %s2 = inlined_call_operand.hbm [shape: f32[2,8,32], index: 2, kind: output, shape index: {0}]
  %s3 = inlined_call_operand.hbm [shape: f32[2,8,32], index: 3, kind: output, shape index: {1}]
  %s4 = inlined_call_operand.vmem [shape: f32[2,8,1], index: 4, kind: output, shape index: {2}]
  %5 = xla_tuple %s2, %s3, %s4
  %s6 = sld [smem:[#allocation0]]
  $region69: #{tpu_custom_call.1} parent=0
    _
  %s8 = ssub.s32 1, %s6
  %s9 = scalar_select 0, %s8, %s6
  $region1: #{tpu_custom_call.1} parent=0
    #allocation2 [shape = 'u8[65536]{0}', space=vmem, size = 0x10000, scoped, tag = 'input window, operand 0']
    #allocation3 [shape = 's32[2]{0}', space=sflag, size = 0x8, scoped, tag = 'scoped memory for tpu_custom_call.1']
    #allocation4 [shape = 's32[2]{0}', space=sflag, size = 0x8, scoped, tag = 'scoped memory for tpu_custom_call.1']
    #allocation5 [shape = 'u8[2048]{0}', space=vmem, size = 0x800, scoped, tag = 'input window, operand 1']
    #allocation6 [shape = 's32[2]{0}', space=sflag, size = 0x8, scoped, tag = 'scoped memory for tpu_custom_call.1']
    #allocation7 [shape = 'u8[8192]{0}', space=vmem, size = 0x2000, scoped, tag = 'output window, operand 0']
    #allocation8 [shape = 'u8[8192]{0}', space=vmem, size = 0x2000, scoped, tag = 'output window, operand 1']
    #allocation9 [shape = 's32[2]{0}', space=sflag, size = 0x8, scoped, tag = 'scoped memory for tpu_custom_call.1']
    %10 = vsyncpa [#allocation3], 0
    %s11 = scalar_lea.sflag [#allocation3], 1
    %12 = vsyncpa %s11, 0
    %13 = vsyncpa [#allocation6], 0
    %s14 = scalar_lea.sflag [#allocation6], 1
    %15 = vsyncpa %s14, 0
    %16 = vsyncpa [#allocation4], 0
    %s17 = scalar_lea.sflag [#allocation4], 1
    %18 = vsyncpa %s17, 0
    %19 = vsyncpa [#allocation9], 0
    %s20 = scalar_lea.sflag [#allocation9], 1
    %21 = vsyncpa %s20, 0
    loop: start=0, step=1, limit=4
    $region2: #{tpu_custom_call.1} parent=1 // loop_pre_header
      _
    $region3: #{tpu_custom_call.1} parent=1 // loop_header
      %s23 = sphi 0, %s27
      %p24 = scmp.ge.s32.totalorder %s23, 4
      %s30 = sphi 0, %s42
      %s31 = sphi 0, %s38
      %s32 = sphi 0, %s30
      %s33 = sphi 0, %s31
      %s34 = sphi 0, %s32
      %s35 = sphi 0, %s33
      %s47 = sphi 0, %s49
      %s50 = sphi 0, %s47
      %s51 = sphi 0, %s50
      %s67 = sphi 0, %s51
      %s75 = sphi 0, %s77
      %s78 = sphi 0, %s75
      %s79 = sphi 0, %s78
      %s95 = sphi 0, %s79
      %s101 = sphi 0, %s103
      %s104 = sphi 0, %s101
      %s105 = sphi 0, %s104
      %s121 = sphi 0, %s105
      %s127 = sphi 0, %s129
      %s130 = sphi 0, %s127
      %s131 = sphi 0, %s130
      %s147 = sphi 0, %s131
      %s153 = sphi 0, %s155
      %s156 = sphi 0, %s153
      %s157 = sphi 0, %s156
      %s173 = sphi 0, %s157
    $region4: #{tpu_custom_call.1} parent=1 // loop_header_branch
      %26 = sbr.rel (%p24) target = $region8
    $region5: #{tpu_custom_call.1} parent=1 // loop_body
      %s28 = ssub.s32 %s23, 1
      %s29 = ssub.s32 %s23, 2
      %s36 = sadd.s32 1, %s31
      %p37 = scmp.ge.s32.totalorder %s36, 1
      %s38 = scalar_select %p37, 0, %s36
      %s39 = sadd.s32 1, %s30
      %s40 = scalar_select %p37, %s39, %s30
      %p41 = scmp.ge.s32.totalorder %s40, 2
      %s42 = scalar_select %p41, 0, %s40
      %s43 = ssub.s32 %s30, %s42
      %s44 = ssub.s32 %s31, %s38
      %s45 = sor.u32 %s43, %s44
      %p46 = scmp.eq.s32.totalorder %s45, 0
      %s48 = sadd.s32 %s47, 1
      %s49 = scalar_select %p46, %s47, %s48
      %p52 = pneg %p46
      %p53 = scmp.eq.s32.totalorder %s23, 1
      %p54 = por %p52, %p53
      %p55 = scmp.ne.s32.totalorder %s47, %s50
      %p56 = scmp.eq.s32.totalorder %s23, 0
      %p57 = por %p55, %p56
      %p58 = scmp.ne.s32.totalorder %s47, %s50
      %p59 = scmp.eq.s32.totalorder %s28, 1
      %p60 = por %p58, %p59
      %p61 = scmp.ne.s32.totalorder %s50, %s51
      %p62 = scmp.eq.s32.totalorder %s28, 0
      %p63 = por %p61, %p62
      %p64 = scmp.ne.s32.totalorder %s50, %s51
      %p65 = scmp.eq.s32.totalorder %s29, 1
      %p66 = por %p64, %p65
      %p68 = scmp.ne.s32.totalorder %s51, %s67
      %p69 = scmp.eq.s32.totalorder %s29, 0
      %p70 = por %p68, %p69
      %s71 = ssub.s32 %s30, %s42
      %s72 = ssub.s32 %s31, %s38
      %s73 = sor.u32 %s71, %s72
      %p74 = scmp.eq.s32.totalorder %s73, 0
      %s76 = sadd.s32 %s75, 1
      %s77 = scalar_select %p74, %s75, %s76
      %p80 = pneg %p74
      %p81 = scmp.eq.s32.totalorder %s23, 1
      %p82 = por %p80, %p81
      %p83 = scmp.ne.s32.totalorder %s75, %s78
      %p84 = scmp.eq.s32.totalorder %s23, 0
      %p85 = por %p83, %p84
      %p86 = scmp.ne.s32.totalorder %s75, %s78
      %p87 = scmp.eq.s32.totalorder %s28, 1
      %p88 = por %p86, %p87
      %p89 = scmp.ne.s32.totalorder %s78, %s79
      %p90 = scmp.eq.s32.totalorder %s28, 0
      %p91 = por %p89, %p90
      %p92 = scmp.ne.s32.totalorder %s78, %s79
      %p93 = scmp.eq.s32.totalorder %s29, 1
      %p94 = por %p92, %p93
      %p96 = scmp.ne.s32.totalorder %s79, %s95
      %p97 = scmp.eq.s32.totalorder %s29, 0
      %p98 = por %p96, %p97
      %s99 = ssub.s32 %s30, %s42
      %p100 = scmp.eq.s32.totalorder %s99, 0
      %s102 = sadd.s32 %s101, 1
      %s103 = scalar_select %p100, %s101, %s102
      %p106 = pneg %p100
      %p107 = scmp.eq.s32.totalorder %s23, 1
      %p108 = por %p106, %p107
      %p109 = scmp.ne.s32.totalorder %s101, %s104
      %p110 = scmp.eq.s32.totalorder %s23, 0
      %p111 = por %p109, %p110
      %p112 = scmp.ne.s32.totalorder %s101, %s104
      %p113 = scmp.eq.s32.totalorder %s28, 1
      %p114 = por %p112, %p113
      %p115 = scmp.ne.s32.totalorder %s104, %s105
      %p116 = scmp.eq.s32.totalorder %s28, 0
      %p117 = por %p115, %p116
      %p118 = scmp.ne.s32.totalorder %s104, %s105
      %p119 = scmp.eq.s32.totalorder %s29, 1
      %p120 = por %p118, %p119
      %p122 = scmp.ne.s32.totalorder %s105, %s121
      %p123 = scmp.eq.s32.totalorder %s29, 0
      %p124 = por %p122, %p123
      %s125 = ssub.s32 %s30, %s42
      %p126 = scmp.eq.s32.totalorder %s125, 0
      %s128 = sadd.s32 %s127, 1
      %s129 = scalar_select %p126, %s127, %s128
      %p132 = pneg %p126
      %p133 = scmp.eq.s32.totalorder %s23, 1
      %p134 = por %p132, %p133
      %p135 = scmp.ne.s32.totalorder %s127, %s130
      %p136 = scmp.eq.s32.totalorder %s23, 0
      %p137 = por %p135, %p136
      %p138 = scmp.ne.s32.totalorder %s127, %s130
      %p139 = scmp.eq.s32.totalorder %s28, 1
      %p140 = por %p138, %p139
      %p141 = scmp.ne.s32.totalorder %s130, %s131
      %p142 = scmp.eq.s32.totalorder %s28, 0
      %p143 = por %p141, %p142
      %p144 = scmp.ne.s32.totalorder %s130, %s131
      %p145 = scmp.eq.s32.totalorder %s29, 1
      %p146 = por %p144, %p145
      %p148 = scmp.ne.s32.totalorder %s131, %s147
      %p149 = scmp.eq.s32.totalorder %s29, 0
      %p150 = por %p148, %p149
      %s151 = ssub.s32 %s30, %s42
      %p152 = scmp.eq.s32.totalorder %s151, 0
      %s154 = sadd.s32 %s153, 1
      %s155 = scalar_select %p152, %s153, %s154
      %p158 = pneg %p152
      %p159 = scmp.eq.s32.totalorder %s23, 1
      %p160 = por %p158, %p159
      %p161 = scmp.ne.s32.totalorder %s153, %s156
      %p162 = scmp.eq.s32.totalorder %s23, 0
      %p163 = por %p161, %p162
      %p164 = scmp.ne.s32.totalorder %s153, %s156
      %p165 = scmp.eq.s32.totalorder %s28, 1
      %p166 = por %p164, %p165
      %p167 = scmp.ne.s32.totalorder %s156, %s157
      %p168 = scmp.eq.s32.totalorder %s28, 0
      %p169 = por %p167, %p168
      %p170 = scmp.ne.s32.totalorder %s156, %s157
      %p171 = scmp.eq.s32.totalorder %s29, 1
      %p172 = por %p170, %p171
      %p174 = scmp.ne.s32.totalorder %s157, %s173
      %p175 = scmp.eq.s32.totalorder %s29, 0
      %p176 = por %p174, %p175
      %p177 = scmp.le.s32.totalorder 1, %s23
      %p178 = scmp.lt.s32.totalorder %s23, 3
      %p179 = pnand %p177, %p178
      %p180 = pneg %p179
      // Predicated region
      $region9: #{tpu_custom_call.1} parent=5 // pred_check
        _
      $region10: #{tpu_custom_call.1} parent=5 // pred_check_branch
        %182 = sbr.rel (%p179) target = $region12
      $region11: #{tpu_custom_call.1} parent=5 // pred_region
        %s183 = ssub.s32 %s23, 1
      $region12: #{tpu_custom_call.1} parent=5 // pred_fallthru
        _
      %p184 = scmp.lt.s32.totalorder %s23, 2
      // Predicated region
      $region13: #{tpu_custom_call.1} parent=5 // pred_check
        %p185 = pneg %p184
      $region14: #{tpu_custom_call.1} parent=5 // pred_check_branch
        %187 = sbr.rel (%p185) target = $region16
      $region15: #{tpu_custom_call.1} parent=5 // pred_region
        // Predicated region
        $region17: #{tpu_custom_call.1} parent=15 // pred_check
          %p188 = pneg %p57
        $region18: #{tpu_custom_call.1} parent=15 // pred_check_branch
          %190 = sbr.rel (%p188) target = $region20
        $region19: #{tpu_custom_call.1} parent=15 // pred_region
          %s191 = sand.u32 %s47, 1
          %s192 = scalar_lea.sflag [#allocation3], %s191
          %s193 = sand.u32 %s47, 1
          %s194 = smul.addr %s193, 64
          %s195 = scalar_lea.vmem [#allocation2], %s194
          %s196 = smul.u32 2, %s31
          %s198 = ssub.s32 1024, 1024
          %199 = vsyncadd %s192, %s198
          %s200 = smul.addr %s30, 8
          %s201 = sadd.s32 %s196, %s200
          %s202 = smul.addr %s201, 128
          %s203 = scalar_lea.hbm %s0, %s202
          %s204 = sshll.u32 %s195, 4
          %s205 = int_to_ptr.vmem [resolvable:$true] %s204
          %210 = dma.hbm_to_vmem [thread:$0]  %s203, 1024, %s205, %s192, 256, 256, 16
        $region20: #{tpu_custom_call.1} parent=15 // pred_fallthru
          _
        // Predicated region
        $region21: #{tpu_custom_call.1} parent=15 // pred_check
          %p211 = pneg %p85
        $region22: #{tpu_custom_call.1} parent=15 // pred_check_branch
          %213 = sbr.rel (%p211) target = $region24
        $region23: #{tpu_custom_call.1} parent=15 // pred_region
          %s214 = sand.u32 %s75, 1
          %s215 = scalar_lea.sflag [#allocation6], %s214
          %s216 = sand.u32 %s75, 1
          %s217 = smul.addr %s216, 2
          %s218 = scalar_lea.vmem [#allocation5], %s217
          %s219 = smul.u32 2, %s31
          %s221 = ssub.s32 32, 32
          %222 = vsyncadd %s215, %s221
          %s223 = smul.addr %s30, 2
          %s224 = sadd.s32 %s219, %s223
          %s225 = smul.addr %s224, 16
          %s226 = scalar_lea.hbm %s1, %s225
          %s228 = sshll.u32 %s218, 4
          %s229 = int_to_ptr.vmem [resolvable:$true] %s228
          %231 = dma.hbm_to_vmem [thread:$0]  %s226, 32, %s229, %s215
        $region24: #{tpu_custom_call.1} parent=15 // pred_fallthru
          _
      $region16: #{tpu_custom_call.1} parent=5 // pred_fallthru
        _
      %p232 = scmp.le.s32.totalorder 1, %s23
      %p233 = scmp.lt.s32.totalorder %s23, 3
      %p234 = pnand %p232, %p233
      %p235 = pneg %p234
      // Predicated region
      $region25: #{tpu_custom_call.1} parent=5 // pred_check
        _
      $region26: #{tpu_custom_call.1} parent=5 // pred_check_branch
        %237 = sbr.rel (%p234) target = $region28
      $region27: #{tpu_custom_call.1} parent=5 // pred_region
        %s238 = ssub.s32 %s23, 1
        %s239 = sand.u32 %s50, 1
        %s240 = scalar_lea.sflag [#allocation3], %s239
        %s241 = sand.u32 %s50, 1
        %s242 = smul.addr %s241, 64
        %s243 = scalar_lea.vmem [#allocation2], %s242
        // Predicated region
        $region29: #{tpu_custom_call.1} parent=27 // pred_check
          %p244 = pneg %p63
        $region30: #{tpu_custom_call.1} parent=27 // pred_check_branch
          %246 = sbr.rel (%p244) target = $region32
        $region31: #{tpu_custom_call.1} parent=27 // pred_region
          %247 = dma.done %s240, 1024
        $region32: #{tpu_custom_call.1} parent=27 // pred_fallthru
          _
        %s248 = sand.u32 %s78, 1
        %s249 = scalar_lea.sflag [#allocation6], %s248
        %s250 = sand.u32 %s78, 1
        %s251 = smul.addr %s250, 2
        %s252 = scalar_lea.vmem [#allocation5], %s251
        // Predicated region
        $region33: #{tpu_custom_call.1} parent=27 // pred_check
          %p253 = pneg %p91
        $region34: #{tpu_custom_call.1} parent=27 // pred_check_branch
          %255 = sbr.rel (%p253) target = $region36
        $region35: #{tpu_custom_call.1} parent=27 // pred_region
          %256 = dma.done %s249, 32
        $region36: #{tpu_custom_call.1} parent=27 // pred_fallthru
          _
        %s257 = sand.u32 %s50, 1
        %s258 = scalar_lea.sflag [#allocation3], %s257
        %s259 = sand.u32 %s50, 1
        %s260 = smul.addr %s259, 64
        %s261 = scalar_lea.vmem [#allocation2], %s260
        %p262 = pneg %p63
        %p263 = pneg %p60
        %s264 = sand.u32 %s78, 1
        %s265 = scalar_lea.sflag [#allocation6], %s264
        %s266 = sand.u32 %s78, 1
        %s267 = smul.addr %s266, 2
        %s268 = scalar_lea.vmem [#allocation5], %s267
        %p269 = pneg %p91
        %p270 = pneg %p88
        %p271 = pneg %p117
        %p272 = pneg %p114
        %s273 = sand.u32 %s104, 1
        %s274 = scalar_lea.sflag [#allocation4], %s273
        %s275 = sand.u32 %s104, 1
        %s276 = smul.addr %s275, 8
        %s277 = scalar_lea.vmem [#allocation7], %s276
        %p278 = pneg %p143
        %p279 = pneg %p140
        %s280 = sand.u32 %s130, 1
        %s281 = scalar_lea.sflag [#allocation9], %s280
        %s282 = sand.u32 %s130, 1
        %s283 = smul.addr %s282, 8
        %s284 = scalar_lea.vmem [#allocation8], %s283
        %p285 = pneg %p169
        %p286 = pneg %p166
        %p287 = scmp.lt.s32.totalorder %s32, 1
        %s288 = scalar_select %p287, %s32, 1
        %s289 = smul.addr %s288, 8
        %s290 = scalar_lea.vmem %s4, %s289
        %s291 = smul.u32 2, %s33
        %s292 = smul.u32 2, %s33
        %p293 = scmp.lt.s32.totalorder %s32, 1
        %s294 = scalar_select %p293, %s32, 1
        %s295 = smul.addr %s294, 8
        %s296 = scalar_lea.vmem %s4, %s295
        %p297 = scmp.eq.s32.totalorder %s33, 0
        // Predicated region
        $region37: #{tpu_custom_call.1} parent=27 // pred_check
          %p298 = pneg %p297
        $region38: #{tpu_custom_call.1} parent=27 // pred_check_branch
          %300 = sbr.rel (%p298) target = $region40
        $region39: #{tpu_custom_call.1} parent=27 // pred_region
          %vm301 = vcmask 261120
          %302 = vst.msk [vmem:[%s277] sm:$0xff] %vm301, 0.0
          %303 = vst.msk [vmem:[%s284] sm:$0xff] %vm301, 0.0
          %vm304 = vcmask 7168
          %305 = vst.msk [vmem:[%s296] sm:$0xff] %vm304, 0.0
        $region40: #{tpu_custom_call.1} parent=27 // pred_fallthru
          _
        %v306 = vld [vmem:[%s243] sm:$0xff]
        %v307 = vld [vmem:[%s243 + $0x8] sm:$0xff]
        %v308 = vld [vmem:[%s243 + $0x10] sm:$0xff]
        %v309 = vld [vmem:[%s243 + $0x18] sm:$0xff]
        %v310 = vld [vmem:[%s243 + $0x20] sm:$0xff]
        %v311 = vld [vmem:[%s243 + $0x28] sm:$0xff]
        %v312 = vld [vmem:[%s243 + $0x30] sm:$0xff]
        %v313 = vld [vmem:[%s243 + $0x38] sm:$0xff]
        %v314 = vld [vmem:[%s252] sm:$0x3]
        %s315 = smul.u32 %s33, 256
        %v316 = vlaneseq
        %v317 = vand.u32 %v316, 127
        %v318 = vadd.s32 %v317, 128
        %v319 = vstv %s315
        %v320 = vadd.s32 %v319, %v317
        %v321 = vadd.s32 %v319, %v318
        %vm322 = vcmp.lt.s32.totalorder %v320, 240
        %vm323 = vcmp.lt.s32.totalorder %v321, 240
        %v324 = vlaneseq
        %v325 = vshrl.u32 %v324, 7
        %v326 = vsub.s32 0, %v325
        %v327 = vrot.slane %v314, %v326
        %v328 = vlaneseq
        %v329 = vshrl.u32 %v328, 7
        %v330 = vsub.s32 1, %v329
        %v331 = vrot.slane %v314, %v330
        %v332 = vsel %vm322, %v327, 4294967295
        %v333 = vsel %vm323, %v331, 4294967295
        %v334 = vsel %vm322, 1, 0
        %v335 = vsel %vm323, 1, 0
        %vm336 = vcmp.eq.s32.totalorder %v334, 1
        %vm337 = vcmp.eq.s32.totalorder %v335, 1
        %v338 = vsel %vm336, %v306, 0.0
        %v339 = vsel %vm337, %v307, 0.0
        %v340 = vsel %vm336, %v308, 0.0
        %v341 = vsel %vm337, %v309, 0.0
        %v342 = vsel %vm336, %v310, 0.0
        %v343 = vsel %vm337, %v311, 0.0
        %v344 = vsel %vm336, %v312, 0.0
        %v345 = vsel %vm337, %v313, 0.0
        %v346 = vlaneseq
        %v347 = vshrl.u32 %v346, 7
        %v348 = vlaneseq
        %v349 = vshrl.u32 %v348, 7
        %v350 = vsub.s32 0, %v349
        %v351 = vrot.slane %v332, %v350
        %v352 = vlaneseq
        %v353 = vshrl.u32 %v352, 7
        %v354 = vsub.s32 0, %v353
        %v355 = vrot.slane %v333, %v354
        %vm356 = vcmp.eq.s32.totalorder %v351, %v347
        %vm357 = vcmp.eq.s32.totalorder %v355, %v347
        %v358 = vsel %vm356, 1, 0
        %v359 = vsel %vm357, 1, 0
        %v360 = vcvt.s32.f32 %v358
        %v361 = vcvt.s32.f32 %v359
        %v362 = vld [vmem:[%s277] sm:$0xff]
        %363 = vmatprep.subr.mxu0 0.0
        %364 = vmatpush1.xpose.msra.mxu0 0.0
        %365 = vmatprep.subr.mxu0 0.0
        %366 = vmatpush1.xpose.msra.mxu0 0.0
        %367 = vmatprep.subr.mxu0 0.0
        %368 = vmatpush1.xpose.msra.mxu0 0.0
        %369 = vmatprep.subr.mxu0 0.0
        %370 = vmatpush1.xpose.msra.mxu0 0.0
        %371 = vmatprep.subr.mxu0 0.0
        %372 = vmatpush1.xpose.msra.mxu0 0.0
        %373 = vmatprep.subr.mxu0 0.0
        %374 = vmatpush1.xpose.msra.mxu0 0.0
        %375 = vmatprep.subr.mxu0 0.0
        %376 = vmatpush1.xpose.msra.mxu0 0.0
        %377 = vmatprep.subr.mxu0 0.0
        %378 = vmatpush1.xpose.msra.mxu0 0.0
        %379 = vmatprep.subr.mxu0 0.0
        %380 = vmatpush1.xpose.msra.mxu0 0.0
        %381 = vmatprep.subr.mxu0 0.0
        %382 = vmatpush1.xpose.msra.mxu0 0.0
        %383 = vmatprep.subr.mxu0 0.0
        %384 = vmatpush1.xpose.msra.mxu0 0.0
        %385 = vmatprep.subr.mxu0 0.0
        %386 = vmatpush1.xpose.msra.mxu0 0.0
        %387 = vmatprep.subr.mxu0 %v345
        %388 = vmatpush1.xpose.msra.mxu0 %v344
        %389 = vmatprep.subr.mxu0 %v343
        %390 = vmatpush1.xpose.msra.mxu0 %v342
        %391 = vmatprep.subr.mxu0 %v341
        %392 = vmatpush1.xpose.msra.mxu0 %v340
        %393 = vmatprep.subr.mxu0 %v339
        %394 = vmatpush1.xpose.msra.mxu0 %v338
        %395 = vmatprep.subr.mxu0 0.0
        %396 = vmatpush2.xpose.msra.mxu0 0.0
        %397 = vmatprep.subr.mxu0 0.0
        %398 = vmatpush2.xpose.msra.mxu0 0.0
        %399 = vmatprep.subr.mxu0 0.0
        %400 = vmatpush2.xpose.msra.mxu0 0.0
        %401 = vmatprep.subr.mxu0 0.0
        %402 = vmatpush2.xpose.msra.mxu0 0.0
        %403 = vmatprep.subr.mxu0 0.0
        %404 = vmatpush2.xpose.msra.mxu0 0.0
        %405 = vmatprep.subr.mxu0 0.0
        %406 = vmatpush2.xpose.msra.mxu0 0.0
        %407 = vmatprep.subr.mxu0 0.0
        %408 = vmatpush2.xpose.msra.mxu0 0.0
        %409 = vmatprep.subr.mxu0 0.0
        %410 = vmatpush2.xpose.msra.mxu0 0.0
        %411 = vmatprep.subr.mxu0 0.0
        %412 = vmatpush2.xpose.msra.mxu0 0.0
        %413 = vmatprep.subr.mxu0 0.0
        %414 = vmatpush2.xpose.msra.mxu0 0.0
        %415 = vmatprep.subr.mxu0 0.0
        %416 = vmatpush2.xpose.msra.mxu0 0.0
        %417 = vmatprep.subr.mxu0 0.0
        %418 = vmatpush2.xpose.msra.mxu0 0.0
        %419 = vmatprep.subr.mxu0 0.0
        %420 = vmatpush2.xpose.msra.mxu0 0.0
        %421 = vmatprep.subr.mxu0 0.0
        %422 = vmatpush2.xpose.msra.mxu0 0.0
        %423 = vmatprep.subr.mxu0 0.0
        %424 = vmatpush2.xpose.msra.mxu0 0.0
        %425 = vmatprep.subr.mxu0 0.0
        %426 = vmatpush2.xpose.msra.mxu0 0.0
        %427 = vmatprep.mubr.f32.mxu0 %v361
        %428 = vmatmul.mubr.f32.gmra.mxu0 %v360
        %v429 = vpop.f32.mrf.mxu0
        %v430 = vadd.f32 0.0, %v429
        %v431 = vpop.f32.mrf.mxu0
        %432 = vdwg.mxu0
        %v433 = vadd.f32 %v362, %v430
        %vm434 = vcmask 261120
        %435 = vst.msk [vmem:[%s277] sm:$0xff] %vm434, %v433
        %v436 = vld [vmem:[%s284] sm:$0xff]
        %v437 = vmul.f32 %v338, %v338
        %v438 = vmul.f32 %v339, %v339
        %v439 = vmul.f32 %v340, %v340
        %v440 = vmul.f32 %v341, %v341
        %v441 = vmul.f32 %v342, %v342
        %v442 = vmul.f32 %v343, %v343
        %v443 = vmul.f32 %v344, %v344
        %v444 = vmul.f32 %v345, %v345
        %445 = vmatprep.subr.mxu0 0.0
        %446 = vmatpush1.xpose.msra.mxu0 0.0
        %447 = vmatprep.subr.mxu0 0.0
        %448 = vmatpush1.xpose.msra.mxu0 0.0
        %449 = vmatprep.subr.mxu0 0.0
        %450 = vmatpush1.xpose.msra.mxu0 0.0
        %451 = vmatprep.subr.mxu0 0.0
        %452 = vmatpush1.xpose.msra.mxu0 0.0
        %453 = vmatprep.subr.mxu0 0.0
        %454 = vmatpush1.xpose.msra.mxu0 0.0
        %455 = vmatprep.subr.mxu0 0.0
        %456 = vmatpush1.xpose.msra.mxu0 0.0
        %457 = vmatprep.subr.mxu0 0.0
        %458 = vmatpush1.xpose.msra.mxu0 0.0
        %459 = vmatprep.subr.mxu0 0.0
        %460 = vmatpush1.xpose.msra.mxu0 0.0
        %461 = vmatprep.subr.mxu0 0.0
        %462 = vmatpush1.xpose.msra.mxu0 0.0
        %463 = vmatprep.subr.mxu0 0.0
        %464 = vmatpush1.xpose.msra.mxu0 0.0
        %465 = vmatprep.subr.mxu0 0.0
        %466 = vmatpush1.xpose.msra.mxu0 0.0
        %467 = vmatprep.subr.mxu0 0.0
        %468 = vmatpush1.xpose.msra.mxu0 0.0
        %469 = vmatprep.subr.mxu0 %v444
        %470 = vmatpush1.xpose.msra.mxu0 %v443
        %471 = vmatprep.subr.mxu0 %v442
        %472 = vmatpush1.xpose.msra.mxu0 %v441
        %473 = vmatprep.subr.mxu0 %v440
        %474 = vmatpush1.xpose.msra.mxu0 %v439
        %475 = vmatprep.subr.mxu0 %v438
        %476 = vmatpush1.xpose.msra.mxu0 %v437
        %477 = vmatprep.subr.mxu0 0.0
        %478 = vmatpush2.xpose.msra.mxu0 0.0
        %479 = vmatprep.subr.mxu0 0.0
        %480 = vmatpush2.xpose.msra.mxu0 0.0
        %481 = vmatprep.subr.mxu0 0.0
        %482 = vmatpush2.xpose.msra.mxu0 0.0
        %483 = vmatprep.subr.mxu0 0.0
        %484 = vmatpush2.xpose.msra.mxu0 0.0
        %485 = vmatprep.subr.mxu0 0.0
        %486 = vmatpush2.xpose.msra.mxu0 0.0
        %487 = vmatprep.subr.mxu0 0.0
        %488 = vmatpush2.xpose.msra.mxu0 0.0
        %489 = vmatprep.subr.mxu0 0.0
        %490 = vmatpush2.xpose.msra.mxu0 0.0
        %491 = vmatprep.subr.mxu0 0.0
        %492 = vmatpush2.xpose.msra.mxu0 0.0
        %493 = vmatprep.subr.mxu0 0.0
        %494 = vmatpush2.xpose.msra.mxu0 0.0
        %495 = vmatprep.subr.mxu0 0.0
        %496 = vmatpush2.xpose.msra.mxu0 0.0
        %497 = vmatprep.subr.mxu0 0.0
        %498 = vmatpush2.xpose.msra.mxu0 0.0
        %499 = vmatprep.subr.mxu0 0.0
        %500 = vmatpush2.xpose.msra.mxu0 0.0
        %501 = vmatprep.subr.mxu0 0.0
        %502 = vmatpush2.xpose.msra.mxu0 0.0
        %503 = vmatprep.subr.mxu0 0.0
        %504 = vmatpush2.xpose.msra.mxu0 0.0
        %505 = vmatprep.subr.mxu0 0.0
        %506 = vmatpush2.xpose.msra.mxu0 0.0
        %507 = vmatprep.subr.mxu0 0.0
        %508 = vmatpush2.xpose.msra.mxu0 0.0
        %509 = vmatprep.mubr.f32.mxu0 %v361
        %510 = vmatmul.mubr.f32.gmra.mxu0 %v360
        %v511 = vpop.f32.mrf.mxu0
        %v512 = vadd.f32 0.0, %v511
        %v513 = vpop.f32.mrf.mxu0
        %514 = vdwg.mxu0
        %v515 = vadd.f32 %v436, %v512
        %516 = vst.msk [vmem:[%s284] sm:$0xff] %vm434, %v515
        %v517 = vld [vmem:[%s296] sm:$0xff]
        %v518 = vadd.f32 %v360, %v361
        %519 = vadd.xlane.f32.xlu0 %v518
        %v520 = vpop.xlane.xlu0 %519
        %v521 = vadd.f32 %v517, %v520
        %vm522 = vcmask 7168
        %523 = vst.msk [vmem:[%s296] sm:$0xff] %vm522, %v521
        %s524 = sand.u32 %s104, 1
        %s525 = scalar_lea.sflag [#allocation4], %s524
        %s526 = sand.u32 %s104, 1
        %s527 = smul.addr %s526, 8
        %s528 = scalar_lea.vmem [#allocation7], %s527
        %s529 = sand.u32 %s130, 1
        %s530 = scalar_lea.sflag [#allocation9], %s529
        %s531 = sand.u32 %s130, 1
        %s532 = smul.addr %s531, 8
        %s533 = scalar_lea.vmem [#allocation8], %s532
        %p534 = scmp.lt.s32.totalorder %s32, 1
        %s535 = scalar_select %p534, %s32, 1
        %s536 = smul.addr %s535, 8
        %s537 = scalar_lea.vmem %s4, %s536
        // Predicated region
        $region41: #{tpu_custom_call.1} parent=27 // pred_check
          %p538 = pneg %p114
        $region42: #{tpu_custom_call.1} parent=27 // pred_check_branch
          %540 = sbr.rel (%p538) target = $region44
        $region43: #{tpu_custom_call.1} parent=27 // pred_region
          %s542 = ssub.s32 128, 128
          %543 = vsyncadd %s525, %s542
          %s544 = smul.addr %s32, 128
          %s545 = scalar_lea.hbm %s2, %s544
          %s547 = sshll.u32 %s528, 4
          %s548 = int_to_ptr.vmem [resolvable:$true] %s547
          %550 = dma.vmem_to_hbm [thread:$0]  %s548, 128, %s545, %s525
        $region44: #{tpu_custom_call.1} parent=27 // pred_fallthru
          _
        // Predicated region
        $region45: #{tpu_custom_call.1} parent=27 // pred_check
          %p551 = pneg %p140
        $region46: #{tpu_custom_call.1} parent=27 // pred_check_branch
          %553 = sbr.rel (%p551) target = $region48
        $region47: #{tpu_custom_call.1} parent=27 // pred_region
          %s555 = ssub.s32 128, 128
          %556 = vsyncadd %s530, %s555
          %s557 = smul.addr %s32, 128
          %s558 = scalar_lea.hbm %s3, %s557
          %s560 = sshll.u32 %s533, 4
          %s561 = int_to_ptr.vmem [resolvable:$true] %s560
          %563 = dma.vmem_to_hbm [thread:$0]  %s561, 128, %s558, %s530
        $region48: #{tpu_custom_call.1} parent=27 // pred_fallthru
          _
        // Predicated region
        $region49: #{tpu_custom_call.1} parent=27 // pred_check
          %p564 = pneg %p166
        $region50: #{tpu_custom_call.1} parent=27 // pred_check_branch
          %566 = sbr.rel (%p564) target = $region52
        $region51: #{tpu_custom_call.1} parent=27 // pred_region
          _
        $region52: #{tpu_custom_call.1} parent=27 // pred_fallthru
          _
      $region28: #{tpu_custom_call.1} parent=5 // pred_fallthru
        _
      %p567 = scmp.le.s32.totalorder 2, %s23
      // Predicated region
      $region53: #{tpu_custom_call.1} parent=5 // pred_check
        %p568 = pneg %p567
      $region54: #{tpu_custom_call.1} parent=5 // pred_check_branch
        %570 = sbr.rel (%p568) target = $region56
      $region55: #{tpu_custom_call.1} parent=5 // pred_region
        %s571 = ssub.s32 %s23, 2
        // Predicated region
        $region57: #{tpu_custom_call.1} parent=55 // pred_check
          %p572 = pneg %p120
        $region58: #{tpu_custom_call.1} parent=55 // pred_check_branch
          %574 = sbr.rel (%p572) target = $region60
        $region59: #{tpu_custom_call.1} parent=55 // pred_region
          %s575 = sand.u32 %s105, 1
          %s576 = scalar_lea.sflag [#allocation4], %s575
          %s577 = sand.u32 %s105, 1
          %s578 = smul.addr %s577, 8
          %s579 = scalar_lea.vmem [#allocation7], %s578
          %580 = dma.done %s576, 128
        $region60: #{tpu_custom_call.1} parent=55 // pred_fallthru
          _
        // Predicated region
        $region61: #{tpu_custom_call.1} parent=55 // pred_check
          %p581 = pneg %p146
        $region62: #{tpu_custom_call.1} parent=55 // pred_check_branch
          %583 = sbr.rel (%p581) target = $region64
        $region63: #{tpu_custom_call.1} parent=55 // pred_region
          %s584 = sand.u32 %s131, 1
          %s585 = scalar_lea.sflag [#allocation9], %s584
          %s586 = sand.u32 %s131, 1
          %s587 = smul.addr %s586, 8
          %s588 = scalar_lea.vmem [#allocation8], %s587
          %589 = dma.done %s585, 128
        $region64: #{tpu_custom_call.1} parent=55 // pred_fallthru
          _
        // Predicated region
        $region65: #{tpu_custom_call.1} parent=55 // pred_check
          %p590 = pneg %p172
        $region66: #{tpu_custom_call.1} parent=55 // pred_check_branch
          %592 = sbr.rel (%p590) target = $region68
        $region67: #{tpu_custom_call.1} parent=55 // pred_region
          %p593 = scmp.lt.s32.totalorder %s34, 1
          %s594 = scalar_select %p593, %s34, 1
          %s595 = smul.addr %s594, 8
          %s596 = scalar_lea.vmem %s4, %s595
        $region68: #{tpu_custom_call.1} parent=55 // pred_fallthru
          _
      $region56: #{tpu_custom_call.1} parent=5 // pred_fallthru
        _
    $region6: #{tpu_custom_call.1} parent=1 // loop_footer
      %s27 = sadd.s32 1, %s23
    $region7: #{tpu_custom_call.1} parent=1 // loop_footer_branch
      %22 = sbr.rel target = $region3
    $region8: #{tpu_custom_call.1} parent=1 // loop_exit
      _
    %597 = vsyncpa [#allocation3], 1
    %s598 = scalar_lea.sflag [#allocation3], 1
    %599 = vsyncpa %s598, 1
    %600 = vsyncpa [#allocation6], 1
    %s601 = scalar_lea.sflag [#allocation6], 1
    %602 = vsyncpa %s601, 1
    %603 = vsyncpa [#allocation4], 1
    %s604 = scalar_lea.sflag [#allocation4], 1
    %605 = vsyncpa %s604, 1
    %606 = vsyncpa [#allocation9], 1
    %s607 = scalar_lea.sflag [#allocation9], 1
    %608 = vsyncpa %s607, 1

</llo_original>
